<compile_context>
chip_gen: v5e
topology: v5e:2x2
jax: 0.10.0
libtpu: 0.0.40
codegen_flags: <defaults>
</compile_context>

<pallas_src>
import jax
import jax.numpy as jnp
from jax.experimental import pallas as pl
from jax.experimental.pallas import tpu as pltpu

IN_FEATURES = 32
OUT_FEATURES = 32


def g_net_kernel(x1_ref, x2_ref, wat_ref, wbt_ref, bias_ref, o_ref):
    x1 = x1_ref[...]                       # (TILE_B, 32)
    x2 = x2_ref[...]                       # (TILE_B, 32)
    # VPU does the cheap fuse work (add / mul); MXU does the two matmuls.
    y = (jnp.dot(x1 + x2, wat_ref[...], preferred_element_type=jnp.float32)
         + jnp.dot(x1 * x2, wbt_ref[...], preferred_element_type=jnp.float32)
         + bias_ref[...])                  # bias = 2*ba + bb, broadcasts over rows
    o_ref[...] = y.astype(o_ref.dtype)


def _round_up(x, m):
    return ((x + m - 1) // m) * m


def g_net_forward(x1, x2, wa, ba, wb, bb, *, tile_b=1024):
    """x1, x2: (B, 32) f32.  wa/wb: (32, 32) PyTorch layout (out, in).  ba/bb: (32,)."""
    B = x1.shape[0]

    # Wrapper-side preprocessing (free at XLA level, tiny constants):
    wa_t = wa.T.astype(jnp.float32)                     # (in, out)
    wb_t = wb.T.astype(jnp.float32)                     # (in, out)
    bias_c = (2.0 * ba + bb).reshape(1, OUT_FEATURES).astype(jnp.float32)

    # Batch tile: big (>=1024 rows) to amortize ~0.35us/step overhead, but no
    # larger than the (8-aligned) batch.  Even TILE_B=8192 is only a few MiB
    # of VMEM with 32 features, well within v7x's 64 MiB.
    tb = min(tile_b, max(8, _round_up(B, 8)))
    b_pad = _round_up(B, tb)
    if b_pad != B:
        pad = b_pad - B
        x1 = jnp.pad(x1, ((0, pad), (0, 0)))
        x2 = jnp.pad(x2, ((0, pad), (0, 0)))

    grid = (b_pad // tb,)

    cost = pl.CostEstimate(
        flops=2 * 2 * b_pad * IN_FEATURES * OUT_FEATURES,
        transcendentals=0,
        bytes_accessed=4 * (2 * b_pad * IN_FEATURES          # x1, x2 in
                            + b_pad * OUT_FEATURES           # out
                            + 2 * IN_FEATURES * OUT_FEATURES # weights
                            + OUT_FEATURES),                 # bias
    )

    out = pl.pallas_call(
        g_net_kernel,
        out_shape=jax.ShapeDtypeStruct((b_pad, OUT_FEATURES), jnp.float32),
        grid=grid,
        in_specs=[
            pl.BlockSpec((tb, IN_FEATURES), lambda i: (i, 0)),
            pl.BlockSpec((tb, IN_FEATURES), lambda i: (i, 0)),
            # Constant operands: same block every step, stay VMEM-resident.
            pl.BlockSpec((IN_FEATURES, OUT_FEATURES), lambda i: (0, 0)),
            pl.BlockSpec((IN_FEATURES, OUT_FEATURES), lambda i: (0, 0)),
            pl.BlockSpec((1, OUT_FEATURES), lambda i: (0, 0)),
        ],
        out_specs=pl.BlockSpec((tb, OUT_FEATURES), lambda i: (i, 0)),
        compiler_params=pltpu.CompilerParams(
            dimension_semantics=("parallel",)),   # shards batch tiles across TCs on v7x
        cost_estimate=cost,
    )(x1, x2, wa_t, wb_t, bias_c)

    return out[:B]


def init_params(key):
    # Deterministic init mimicking nn.Linear: U(-1/sqrt(fan_in), 1/sqrt(fan_in))
    bound = 1.0 / jnp.sqrt(jnp.float32(IN_FEATURES))
    k1, k2, k3, k4 = jax.random.split(key, 4)
    wa = jax.random.uniform(k1, (OUT_FEATURES, IN_FEATURES), jnp.float32, -bound, bound)
    ba = jax.random.uniform(k2, (OUT_FEATURES,), jnp.float32, -bound, bound)
    wb = jax.random.uniform(k3, (OUT_FEATURES, IN_FEATURES), jnp.float32, -bound, bound)
    bb = jax.random.uniform(k4, (OUT_FEATURES,), jnp.float32, -bound, bound)
    return wa, ba, wb, bb


if __name__ == "__main__":
    key = jax.random.PRNGKey(0)
    kp, kx1, kx2 = jax.random.split(key, 3)
    wa, ba, wb, bb = init_params(kp)

    B = 8
    x1 = jax.random.normal(kx1, (B, IN_FEATURES), jnp.float32)
    x2 = jax.random.normal(kx2, (B, IN_FEATURES), jnp.float32)

    out = g_net_forward(x1, x2, wa, ba, wb, bb)
    jax.block_until_ready(out)

    # Reference check in plain JAX (original, unfused formulation).
    ref = (x1 @ wa.T + ba) + (x2 @ wa.T + ba) + ((x1 * x2) @ wb.T + bb)
    assert jnp.allclose(out, ref, atol=1e-4, rtol=1e-4), "mismatch vs reference"

    print("KERNEL_OK")
</pallas_src>

<mosaic_0001>
module attributes {stable_mosaic.version = 11 : i64} {
  func.func @g_net_kernel(%arg0: i32, %arg1: memref<8x32xf32, #tpu.memory_space<vmem>>, %arg2: memref<8x32xf32, #tpu.memory_space<vmem>>, %arg3: memref<32x32xf32, #tpu.memory_space<vmem>>, %arg4: memref<32x32xf32, #tpu.memory_space<vmem>>, %arg5: memref<1x32xf32, #tpu.memory_space<vmem>>, %arg6: memref<8x32xf32, #tpu.memory_space<vmem>>) attributes {dimension_semantics = [#tpu.dimension_semantics<parallel>], iteration_bounds = array<i64: 1>, scalar_prefetch = 0 : i64, scratch_operands = 0 : i64, tpu.core_type = #tpu.core_type<tc>, window_params = [{transform_indices = @transform_0, window_bounds = array<i64: 8, 32>}, {transform_indices = @transform_1, window_bounds = array<i64: 8, 32>}, {pipeline_mode = #tpu.pipeline_mode<synchronous>, transform_indices = @transform_2, window_bounds = array<i64: 32, 32>}, {pipeline_mode = #tpu.pipeline_mode<synchronous>, transform_indices = @transform_3, window_bounds = array<i64: 32, 32>}, {pipeline_mode = #tpu.pipeline_mode<synchronous>, transform_indices = @transform_4, window_bounds = array<i64: 1, 32>}, {transform_indices = @transform_5, window_bounds = array<i64: 8, 32>}]} {
    %c0 = arith.constant 0 : index
    %c0_0 = arith.constant 0 : index
    %0 = vector.load %arg1[%c0, %c0_0] : memref<8x32xf32, #tpu.memory_space<vmem>>, vector<8x32xf32>
    %c0_1 = arith.constant 0 : index
    %c0_2 = arith.constant 0 : index
    %1 = vector.load %arg2[%c0_1, %c0_2] : memref<8x32xf32, #tpu.memory_space<vmem>>, vector<8x32xf32>
    %2 = arith.addf %0, %1 : vector<8x32xf32>
    %c0_3 = arith.constant 0 : index
    %c0_4 = arith.constant 0 : index
    %3 = vector.load %arg3[%c0_3, %c0_4] : memref<32x32xf32, #tpu.memory_space<vmem>>, vector<32x32xf32>
    %cst = arith.constant dense<0.000000e+00> : vector<8x32xf32>
    %4 = tpu.matmul %2, %3, %cst {dimension_numbers = #tpu.dot_dimension_numbers<[1], [0], [0], [1], [0, 0, 1, 1], [], []>} : vector<8x32xf32>, vector<32x32xf32>, vector<8x32xf32> -> vector<8x32xf32>
    %5 = arith.mulf %0, %1 : vector<8x32xf32>
    %c0_5 = arith.constant 0 : index
    %c0_6 = arith.constant 0 : index
    %6 = vector.load %arg4[%c0_5, %c0_6] : memref<32x32xf32, #tpu.memory_space<vmem>>, vector<32x32xf32>
    %cst_7 = arith.constant dense<0.000000e+00> : vector<8x32xf32>
    %7 = tpu.matmul %5, %6, %cst_7 {dimension_numbers = #tpu.dot_dimension_numbers<[1], [0], [0], [1], [0, 0, 1, 1], [], []>} : vector<8x32xf32>, vector<32x32xf32>, vector<8x32xf32> -> vector<8x32xf32>
    %8 = arith.addf %4, %7 : vector<8x32xf32>
    %c0_8 = arith.constant 0 : index
    %c0_9 = arith.constant 0 : index
    %9 = vector.load %arg5[%c0_8, %c0_9] : memref<1x32xf32, #tpu.memory_space<vmem>>, vector<1x32xf32>
    %10 = vector.broadcast %9 : vector<1x32xf32> to vector<8x32xf32>
    %11 = arith.addf %8, %10 : vector<8x32xf32>
    %c0_10 = arith.constant 0 : index
    %c0_11 = arith.constant 0 : index
    %12 = vector.load %arg6[%c0_10, %c0_11] : memref<8x32xf32, #tpu.memory_space<vmem>>, vector<8x32xf32>
    tpu.vector_store %arg6[%c0_10, %c0_11], %11 {strides = array<i32>} : memref<8x32xf32, #tpu.memory_space<vmem>>, vector<8x32xf32>,
    return
  }
  func.func @transform_0(%arg0: i32) -> (i32, i32) {
    %c0_i32 = arith.constant 0 : i32
    %c0_i32_0 = arith.constant 0 : i32
    return %arg0, %c0_i32 : i32, i32
  }
  func.func @transform_1(%arg0: i32) -> (i32, i32) {
    %c0_i32 = arith.constant 0 : i32
    %c0_i32_0 = arith.constant 0 : i32
    return %arg0, %c0_i32 : i32, i32
  }
  func.func @transform_2(%arg0: i32) -> (i32, i32) {
    %c0_i32 = arith.constant 0 : i32
    %c0_i32_0 = arith.constant 0 : i32
    %c0_i32_1 = arith.constant 0 : i32
    return %c0_i32, %c0_i32_0 : i32, i32
  }
  func.func @transform_3(%arg0: i32) -> (i32, i32) {
    %c0_i32 = arith.constant 0 : i32
    %c0_i32_0 = arith.constant 0 : i32
    %c0_i32_1 = arith.constant 0 : i32
    return %c0_i32, %c0_i32_0 : i32, i32
  }
  func.func @transform_4(%arg0: i32) -> (i32, i32) {
    %c0_i32 = arith.constant 0 : i32
    %c0_i32_0 = arith.constant 0 : i32
    %c0_i32_1 = arith.constant 0 : i32
    return %c0_i32, %c0_i32_0 : i32, i32
  }
  func.func @transform_5(%arg0: i32) -> (i32, i32) {
    %c0_i32 = arith.constant 0 : i32
    %c0_i32_0 = arith.constant 0 : i32
    return %arg0, %c0_i32 : i32, i32
  }
}

</mosaic_0001>

<llo_original>
// kernel: tpu_custom_call.1
$region0: #{tpu_custom_call.1}
  #allocation0 [shape = 'u32[]', space=smem, size = 0x4, offset = 0x4, fixed_abs, tag = 'smem constant byte address 0x4 - core index']
  #allocation1 [shape = 'u32[72,128]{1,0:T(1,128)}', space=vmem, size = 0x9000, scoped, tag = 'internal scratch']
  %s0 = inlined_call_operand.hbm [shape: f32[8,32], index: 0, kind: input, shape index: {}]
  %s1 = inlined_call_operand.hbm [shape: f32[8,32], index: 1, kind: input, shape index: {}]
  %s2 = inlined_call_operand.hbm [shape: f32[32,32], index: 2, kind: input, shape index: {}]
  %s3 = inlined_call_operand.hbm [shape: f32[32,32], index: 3, kind: input, shape index: {}]
  %s4 = inlined_call_operand.vmem [shape: f32[1,32], index: 4, kind: input, shape index: {}]
  %s5 = inlined_call_operand.hbm [shape: f32[8,32], index: 5, kind: output, shape index: {}]
  %s6 = sld [smem:[#allocation0]]
  $region46: #{tpu_custom_call.1} parent=0
    _
  %s8 = ssub.s32 1, %s6
  %s9 = scalar_select 0, %s8, %s6
  $region1: #{tpu_custom_call.1} parent=0
    #allocation2 [shape = 'u8[4096]{0}', space=vmem, size = 0x1000, scoped, tag = 'input window, operand 0, single buffered']
    #allocation3 [shape = 's32[1]{0}', space=sflag, size = 0x4, scoped, tag = 'scoped memory for tpu_custom_call.1']
    #allocation4 [shape = 's32[1]{0}', space=sflag, size = 0x4, scoped, tag = 'scoped memory for tpu_custom_call.1']
    #allocation5 [shape = 'u8[4096]{0}', space=vmem, size = 0x1000, scoped, tag = 'input window, operand 1, single buffered']
    #allocation6 [shape = 's32[1]{0}', space=sflag, size = 0x4, scoped, tag = 'scoped memory for tpu_custom_call.1']
    #allocation7 [shape = 'u8[16384]{0}', space=vmem, size = 0x4000, scoped, tag = 'input window, operand 2, single buffered']
    #allocation8 [shape = 'u8[16384]{0}', space=vmem, size = 0x4000, scoped, tag = 'input window, operand 3, single buffered']
    #allocation9 [shape = 's32[1]{0}', space=sflag, size = 0x4, scoped, tag = 'scoped memory for tpu_custom_call.1']
    #allocation10 [shape = 'u8[4096]{0}', space=vmem, size = 0x1000, scoped, tag = 'output window, operand 0, single buffered']
    %10 = vsyncpa [#allocation3], 0
    %11 = vsyncpa [#allocation6], 0
    %12 = vsyncpa [#allocation9], 0
    %13 = vsyncpa [#allocation4], 0
    // Predicated region
    $region2: #{tpu_custom_call.1} parent=1 // pred_check
      _
    $region3: #{tpu_custom_call.1} parent=1 // pred_check_branch
      %15 = sbr.rel (0) target = $region5
    $region4: #{tpu_custom_call.1} parent=1 // pred_region
      %17 = vsyncadd [#allocation3], 0
      %s19 = sshll.u32 %s0, 4
      %s20 = int_to_ptr.hbm [resolvable:$true] %s19
      %s21 = sshll.u32 [#allocation2], 4
      %s22 = int_to_ptr.vmem [resolvable:$true] %s21
      %24 = dma.hbm_to_vmem [thread:$0]  %s20, 128, %s22, [#allocation3]
    $region5: #{tpu_custom_call.1} parent=1 // pred_fallthru
      _
    // Predicated region
    $region6: #{tpu_custom_call.1} parent=1 // pred_check
      _
    $region7: #{tpu_custom_call.1} parent=1 // pred_check_branch
      %26 = sbr.rel (0) target = $region9
    $region8: #{tpu_custom_call.1} parent=1 // pred_region
      %28 = vsyncadd [#allocation6], 0
      %s30 = sshll.u32 %s1, 4
      %s31 = int_to_ptr.hbm [resolvable:$true] %s30
      %s32 = sshll.u32 [#allocation5], 4
      %s33 = int_to_ptr.vmem [resolvable:$true] %s32
      %35 = dma.hbm_to_vmem [thread:$0]  %s31, 128, %s33, [#allocation6]
    $region9: #{tpu_custom_call.1} parent=1 // pred_fallthru
      _
    // Predicated region
    $region10: #{tpu_custom_call.1} parent=1 // pred_check
      _
    $region11: #{tpu_custom_call.1} parent=1 // pred_check_branch
      %37 = sbr.rel (0) target = $region13
    $region12: #{tpu_custom_call.1} parent=1 // pred_region
      %39 = vsyncadd [#allocation6], 0
      %s40 = sshll.u32 %s2, 4
      %s41 = int_to_ptr.hbm [resolvable:$true] %s40
      %s42 = sshll.u32 [#allocation7], 4
      %s43 = int_to_ptr.vmem [resolvable:$true] %s42
      %48 = dma.hbm_to_vmem [thread:$0]  %s41, 512, %s43, [#allocation6], 128, 128, 8
    $region13: #{tpu_custom_call.1} parent=1 // pred_fallthru
      _
    // Predicated region
    $region14: #{tpu_custom_call.1} parent=1 // pred_check
      _
    $region15: #{tpu_custom_call.1} parent=1 // pred_check_branch
      %50 = sbr.rel (0) target = $region17
    $region16: #{tpu_custom_call.1} parent=1 // pred_region
      %52 = vsyncadd [#allocation9], 0
      %s53 = sshll.u32 %s3, 4
      %s54 = int_to_ptr.hbm [resolvable:$true] %s53
      %s55 = sshll.u32 [#allocation8], 4
      %s56 = int_to_ptr.vmem [resolvable:$true] %s55
      %61 = dma.hbm_to_vmem [thread:$0]  %s54, 512, %s56, [#allocation9], 128, 128, 8
    $region17: #{tpu_custom_call.1} parent=1 // pred_fallthru
      _
    // Predicated region
    $region18: #{tpu_custom_call.1} parent=1 // pred_check
      _
    $region19: #{tpu_custom_call.1} parent=1 // pred_check_branch
      %63 = sbr.rel (0) target = $region21
    $region20: #{tpu_custom_call.1} parent=1 // pred_region
      _
    $region21: #{tpu_custom_call.1} parent=1 // pred_fallthru
      _
    // Predicated region
    $region22: #{tpu_custom_call.1} parent=1 // pred_check
      _
    $region23: #{tpu_custom_call.1} parent=1 // pred_check_branch
      %65 = sbr.rel (0) target = $region25
    $region24: #{tpu_custom_call.1} parent=1 // pred_region
      %67 = dma.done [#allocation3], 128
    $region25: #{tpu_custom_call.1} parent=1 // pred_fallthru
      _
    // Predicated region
    $region26: #{tpu_custom_call.1} parent=1 // pred_check
      _
    $region27: #{tpu_custom_call.1} parent=1 // pred_check_branch
      %69 = sbr.rel (0) target = $region29
    $region28: #{tpu_custom_call.1} parent=1 // pred_region
      %71 = dma.done [#allocation6], 128
    $region29: #{tpu_custom_call.1} parent=1 // pred_fallthru
      _
    // Predicated region
    $region30: #{tpu_custom_call.1} parent=1 // pred_check
      _
    $region31: #{tpu_custom_call.1} parent=1 // pred_check_branch
      %73 = sbr.rel (0) target = $region33
    $region32: #{tpu_custom_call.1} parent=1 // pred_region
      %75 = dma.done [#allocation6], 512
    $region33: #{tpu_custom_call.1} parent=1 // pred_fallthru
      _
    // Predicated region
    $region34: #{tpu_custom_call.1} parent=1 // pred_check
      _
    $region35: #{tpu_custom_call.1} parent=1 // pred_check_branch
      %77 = sbr.rel (0) target = $region37
    $region36: #{tpu_custom_call.1} parent=1 // pred_region
      %79 = dma.done [#allocation9], 512
    $region37: #{tpu_custom_call.1} parent=1 // pred_fallthru
      _
    %v80 = vld [vmem:[#allocation2] sm:$0xff]
    %v81 = vld [vmem:[#allocation5] sm:$0xff]
    %v82 = vadd.f32 %v80, %v81
    %v83 = vld [vmem:[#allocation7] sm:$0xff]
    %v84 = vld [vmem:[#allocation7 + $0x8] sm:$0xff]
    %v85 = vld [vmem:[#allocation7 + $0x10] sm:$0xff]
    %v86 = vld [vmem:[#allocation7 + $0x18] sm:$0xff]
    %v87 = vmul.f32 %v80, %v81
    %v88 = vld [vmem:[#allocation8] sm:$0xff]
    %v89 = vld [vmem:[#allocation8 + $0x8] sm:$0xff]
    %v90 = vld [vmem:[#allocation8 + $0x10] sm:$0xff]
    %v91 = vld [vmem:[#allocation8 + $0x18] sm:$0xff]
    %vm92 = vcmask 261120
    %v94 = vsel %vm92, %v87, 0
    %96 = vmatpush.msra.mxu0 0.0
    %97 = vmatpush.msra.mxu0 0.0
    %98 = vmatpush.msra.mxu0 0.0
    %99 = vmatpush.msra.mxu0 0.0
    %100 = vmatpush.msra.mxu0 0.0
    %101 = vmatpush.msra.mxu0 0.0
    %102 = vmatpush.msra.mxu0 0.0
    %103 = vmatpush.msra.mxu0 0.0
    %104 = vmatpush.msra.mxu0 0.0
    %105 = vmatpush.msra.mxu0 0.0
    %106 = vmatpush.msra.mxu0 0.0
    %107 = vmatpush.msra.mxu0 0.0
    %108 = vmatpush.msra.mxu0 %v91
    %109 = vmatpush.msra.mxu0 %v90
    %110 = vmatpush.msra.mxu0 %v89
    %111 = vmatpush.msra.mxu0 %v88
    %112 = vmatmul.f32.gmra.mxu0 %v94
    %v113 = vpop.f32.mrf.mxu0
    %v114 = vadd.f32 0.0, %v113
    %115 = vdwg.mxu0
    %v117 = vsel %vm92, %v82, 0
    %119 = vmatpush.msra.mxu0 0.0
    %120 = vmatpush.msra.mxu0 0.0
    %121 = vmatpush.msra.mxu0 0.0
    %122 = vmatpush.msra.mxu0 0.0
    %123 = vmatpush.msra.mxu0 0.0
    %124 = vmatpush.msra.mxu0 0.0
    %125 = vmatpush.msra.mxu0 0.0
    %126 = vmatpush.msra.mxu0 0.0
    %127 = vmatpush.msra.mxu0 0.0
    %128 = vmatpush.msra.mxu0 0.0
    %129 = vmatpush.msra.mxu0 0.0
    %130 = vmatpush.msra.mxu0 0.0
    %131 = vmatpush.msra.mxu0 %v86
    %132 = vmatpush.msra.mxu0 %v85
    %133 = vmatpush.msra.mxu0 %v84
    %134 = vmatpush.msra.mxu0 %v83
    %135 = vmatmul.f32.gmra.mxu0 %v117
    %v136 = vpop.f32.mrf.mxu0
    %v137 = vadd.f32 %v114, %v136
    %138 = vdwg.mxu0
    %v139 = vld [vmem:[%s4] sm:$0x1]
    %v141 = vperm.slane %v139, 0
    %v143 = vadd.f32 %v137, %v141
    %144 = vst.msk [vmem:[#allocation10] sm:$0xff] %vm92, %v143
    // Predicated region
    $region38: #{tpu_custom_call.1} parent=1 // pred_check
      _
    $region39: #{tpu_custom_call.1} parent=1 // pred_check_branch
      %146 = sbr.rel (0) target = $region41
    $region40: #{tpu_custom_call.1} parent=1 // pred_region
      %148 = vsyncadd [#allocation4], 0
      %s150 = sshll.u32 [#allocation10], 4
      %s151 = int_to_ptr.vmem [resolvable:$true] %s150
      %s152 = sshll.u32 %s5, 4
      %s153 = int_to_ptr.hbm [resolvable:$true] %s152
      %155 = dma.vmem_to_hbm [thread:$0]  %s151, 128, %s153, [#allocation4]
    $region41: #{tpu_custom_call.1} parent=1 // pred_fallthru
      _
    // Predicated region
    $region42: #{tpu_custom_call.1} parent=1 // pred_check
      _
    $region43: #{tpu_custom_call.1} parent=1 // pred_check_branch
      %157 = sbr.rel (0) target = $region45
    $region44: #{tpu_custom_call.1} parent=1 // pred_region
      %159 = dma.done [#allocation4], 128
    $region45: #{tpu_custom_call.1} parent=1 // pred_fallthru
      _
    %160 = vsyncpa [#allocation3], 1
    %161 = vsyncpa [#allocation6], 1
    %162 = vsyncpa [#allocation9], 1
    %163 = vsyncpa [#allocation4], 1

</llo_original>
